<compile_context>
chip_gen: v6e
topology: v6e:2x2x1
jax: 0.10.0
libtpu: 0.0.40
codegen_flags: <defaults>
</compile_context>

<pallas_src>
import functools

import jax
import jax.numpy as jnp
from jax import lax
from jax.experimental import pallas as pl
from jax.experimental.pallas import tpu as pltpu

_LANE = 128


def _round_up(x, m):
    return (x + m - 1) // m * m


# --------------------------------------------------------------------------- #
# Kernel
# --------------------------------------------------------------------------- #
def _uncertainty_kernel(x_ref, w_ref, b_ref, out_ref, *, pred_len):
    # Single fused MXU pass: z = x @ [Wm | Wv | 0] + [bm | bv | 0] -> (tb, W) f32
    z = jnp.dot(x_ref[...], w_ref[...],
                preferred_element_type=jnp.float32) + b_ref[...]

    tb, width = out_ref.shape
    col = lax.broadcasted_iota(jnp.int32, (tb, width), 1)
    # Columns [0, P) are the mean head, [P, 2P) the std head, [2P, width) pad.
    is_mean = col < pred_len

    # std = exp(clip(0.5 * z, -5, 1.5)).
    # GUARD: this folding is equivalent to the original
    #   clamp(exp(0.5 * clamp(z, -10, 3)), 1e-6, 10)
    # for finite, +/-inf and NaN z only because exp(-5)~6.7e-3 > 1e-6 and
    # exp(1.5)~4.48 < 10; re-derive it if the module's clamp bounds change.
    std = jnp.exp(jnp.clip(0.5 * z, -5.0, 1.5))

    # nan_to_num: mean NaN -> 0.0, std NaN -> 1.0.  One isnan pass on z is
    # enough: exp/clip of a non-NaN input cannot produce NaN.
    nan = jnp.isnan(z)
    fill = jnp.where(is_mean, 0.0, 1.0)
    out = jnp.where(nan, fill, jnp.where(is_mean, z, std))

    out_ref[...] = out.astype(out_ref.dtype)


# --------------------------------------------------------------------------- #
# Parameter fusion (do ONCE per set of weights, not per forward call)
# --------------------------------------------------------------------------- #
def fuse_uncertainty_params(wm, bm, wv, bv):
    """Fuse the two heads into one lane-padded weight/bias.

    wm/wv: [D, P] (pre-transposed nn.Linear weights), bm/bv: [1, P] or [P].
    Returns (w_fused [D, width], b_fused [1, width]) with width = max(128,
    round_up(2P, 128)); padding columns are zero.
    """
    D, P = wm.shape
    width = max(_LANE, _round_up(2 * P, _LANE))
    bm2 = jnp.reshape(bm, (1, P)).astype(jnp.float32)
    bv2 = jnp.reshape(bv, (1, P)).astype(jnp.float32)
    w = (jnp.zeros((D, width), jnp.float32)
         .at[:, :P].set(wm.astype(jnp.float32))
         .at[:, P:2 * P].set(wv.astype(jnp.float32)))
    b = (jnp.zeros((1, width), jnp.float32)
         .at[:, :P].set(bm2)
         .at[:, P:2 * P].set(bv2))
    return w, b


# --------------------------------------------------------------------------- #
# Tile / VMEM selection
# --------------------------------------------------------------------------- #
def _vmem_budget_bytes():
    """~half of physical VMEM: 64 MiB on v5e/v6e (128 MiB phys), 32 MiB on v7x."""
    phys = 64 << 20
    try:
        info = pltpu.get_tpu_info()
        phys = int(getattr(info, "vmem_capacity_bytes", phys))
    except Exception:
        pass
    return max(16 << 20, min(phys // 2, 64 << 20))


def _pick_batch_tile(B, D, width, budget):
    """Largest batch tile that fits the VMEM budget (multiple of 8), with a
    2-even-step grid for large B so both v7x TensorCores get work."""
    resident = 2 * (D * width + width) * 4          # fused W + b (double-buffered)
    tile_budget = max(budget - resident - (2 << 20), 1 << 20)
    bytes_per_row = 2 * (D + width) * 4             # double-buffered x + out tiles
    cap = max(8, (tile_budget // bytes_per_row) // 8 * 8)
    if B <= cap:
        if B >= 1024:
            # split into an even 2-step grid for megacore parallelism
            return min(cap, _round_up(pl.cdiv(B, 2), 8))
        return B        # single step; tb == full batch dim (no 8-mult needed)
    return cap


# --------------------------------------------------------------------------- #
# Forward
# --------------------------------------------------------------------------- #
def uncertainty_forward(x, w_fused, b_fused, pred_len):
    """x: [B, D]; (w_fused, b_fused) from fuse_uncertainty_params.

    Returns (mean, std), each [B, pred_len] float32.
    """
    B, D = x.shape
    width = w_fused.shape[1]

    budget = _vmem_budget_bytes()
    tb = _pick_batch_tile(B, D, width, budget)
    grid = (pl.cdiv(B, tb),)   # ragged last block is padded/masked by Pallas

    out = pl.pallas_call(
        functools.partial(_uncertainty_kernel, pred_len=pred_len),
        out_shape=jax.ShapeDtypeStruct((B, width), jnp.float32),
        grid_spec=pltpu.PrefetchScalarGridSpec(
            num_scalar_prefetch=0,
            grid=grid,
            in_specs=[
                pl.BlockSpec((tb, D), lambda i: (i, 0)),        # x tile
                # Grid-invariant fused weight / bias (fetched once).
                # NOTE: at large D/P mark these pipeline_mode=pl.Buffered(1)
                # to drop the unused second buffer; at D=32, width=128 the
                # extra copy is ~16 KB so the default is kept here.
                pl.BlockSpec((D, width), lambda i: (0, 0)),
                pl.BlockSpec((1, width), lambda i: (0, 0)),
            ],
            out_specs=pl.BlockSpec((tb, width), lambda i: (i, 0)),
        ),
        compiler_params=pltpu.CompilerParams(
            dimension_semantics=("parallel",),
            vmem_limit_bytes=budget),
    )(x, w_fused, b_fused)

    # TODO(synk): when pred_len is a multiple of 128 the kernel could emit two
    # lane-aligned outputs directly and skip these wrapper slices.
    return out[:, :pred_len], out[:, pred_len:2 * pred_len]


def uncertainty_estimator(x, wm, bm, wv, bv):
    """One-shot convenience wrapper.  For repeated calls with fixed weights,
    call fuse_uncertainty_params() once and use uncertainty_forward()."""
    P = wm.shape[1]
    w, b = fuse_uncertainty_params(wm, bm, wv, bv)
    return uncertainty_forward(x, w, b, P)


# --------------------------------------------------------------------------- #
# Reference + test
# --------------------------------------------------------------------------- #
def _init_linear(key, in_dim, out_dim):
    """Deterministic nn.Linear-style init: U(-1/sqrt(in), 1/sqrt(in))."""
    kw, kb = jax.random.split(key)
    bound = 1.0 / (in_dim ** 0.5)
    w = jax.random.uniform(kw, (in_dim, out_dim), jnp.float32, -bound, bound)
    b = jax.random.uniform(kb, (1, out_dim), jnp.float32, -bound, bound)
    return w, b


def _reference(x, wm, bm, wv, bv):
    mean = x @ wm + bm
    log_var = jnp.clip(x @ wv + bv, -10.0, 3.0)
    std = jnp.clip(jnp.exp(0.5 * log_var), 1e-6, 10.0)
    mean = jnp.where(jnp.isnan(mean), 0.0, mean)
    std = jnp.where(jnp.isnan(std), 1.0, std)
    return mean, std


if __name__ == "__main__":
    batch, input_dim, pred_len = 8, 32, 16

    key = jax.random.PRNGKey(0)
    kx, km, kv = jax.random.split(key, 3)

    x = jax.random.normal(kx, (batch, input_dim), jnp.float32)
    x = x.at[0, 0].set(jnp.nan)   # exercise the nan_to_num path
    wm, bm = _init_linear(km, input_dim, pred_len)
    wv, bv = _init_linear(kv, input_dim, pred_len)

    # Fuse / pad the params once (hoisted out of the per-call path).
    w_fused, b_fused = fuse_uncertainty_params(wm, bm, wv, bv)

    mean, std = uncertainty_forward(x, w_fused, b_fused, pred_len)
    jax.block_until_ready((mean, std))

    mean_ref, std_ref = _reference(x, wm, bm, wv, bv)
    assert mean.shape == (batch, pred_len) and std.shape == (batch, pred_len)
    assert jnp.allclose(mean, mean_ref, atol=1e-5, rtol=1e-5)
    assert jnp.allclose(std, std_ref, atol=1e-5, rtol=1e-5)
    assert jnp.all(mean[0] == 0.0) and jnp.all(std[0] == 1.0)   # NaN row handled

    # Large batch: 2-step even grid (tb=1024) -> both v7x TCs get work.
    big_b = 2048
    xb = jax.random.normal(jax.random.PRNGKey(1), (big_b, input_dim), jnp.float32)
    mean_b, std_b = uncertainty_forward(xb, w_fused, b_fused, pred_len)
    jax.block_until_ready((mean_b, std_b))
    mean_br, std_br = _reference(xb, wm, bm, wv, bv)
    assert jnp.allclose(mean_b, mean_br, atol=1e-5, rtol=1e-5)
    assert jnp.allclose(std_b, std_br, atol=1e-5, rtol=1e-5)

    # Ragged batch (1048 = 8*131): cdiv grid with a padded/masked last block,
    # plus the one-shot convenience wrapper.
    rag_b = 1048
    xr = jax.random.normal(jax.random.PRNGKey(2), (rag_b, input_dim), jnp.float32)
    mean_r, std_r = uncertainty_estimator(xr, wm, bm, wv, bv)
    jax.block_until_ready((mean_r, std_r))
    mean_rr, std_rr = _reference(xr, wm, bm, wv, bv)
    assert mean_r.shape == (rag_b, pred_len)
    assert jnp.allclose(mean_r, mean_rr, atol=1e-5, rtol=1e-5)
    assert jnp.allclose(std_r, std_rr, atol=1e-5, rtol=1e-5)

    print("KERNEL_OK")
</pallas_src>

<mosaic_0001>
module attributes {stable_mosaic.version = 11 : i64} {
  func.func @_uncertainty_kernel(%arg0: i32, %arg1: memref<8x32xf32, #tpu.memory_space<vmem>>, %arg2: memref<32x128xf32, #tpu.memory_space<vmem>>, %arg3: memref<1x128xf32, #tpu.memory_space<vmem>>, %arg4: memref<8x128xf32, #tpu.memory_space<vmem>>) attributes {dimension_semantics = [#tpu.dimension_semantics<parallel>], iteration_bounds = array<i64: 1>, scalar_prefetch = 0 : i64, scratch_operands = 0 : i64, tpu.core_type = #tpu.core_type<tc>, window_params = [{transform_indices = @transform_0, window_bounds = array<i64: 8, 32>}, {pipeline_mode = #tpu.pipeline_mode<synchronous>, transform_indices = @transform_1, window_bounds = array<i64: 32, 128>}, {pipeline_mode = #tpu.pipeline_mode<synchronous>, transform_indices = @transform_2, window_bounds = array<i64: 1, 128>}, {transform_indices = @transform_3, window_bounds = array<i64: 8, 128>}]} {
    %c0 = arith.constant 0 : index
    %c0_0 = arith.constant 0 : index
    %0 = vector.load %arg1[%c0, %c0_0] : memref<8x32xf32, #tpu.memory_space<vmem>>, vector<8x32xf32>
    %c0_1 = arith.constant 0 : index
    %c0_2 = arith.constant 0 : index
    %1 = vector.load %arg2[%c0_1, %c0_2] : memref<32x128xf32, #tpu.memory_space<vmem>>, vector<32x128xf32>
    %cst = arith.constant dense<0.000000e+00> : vector<8x128xf32>
    %2 = tpu.matmul %0, %1, %cst {dimension_numbers = #tpu.dot_dimension_numbers<[1], [0], [0], [1], [0, 0, 1, 1], [], []>} : vector<8x32xf32>, vector<32x128xf32>, vector<8x128xf32> -> vector<8x128xf32>
    %c0_3 = arith.constant 0 : index
    %c0_4 = arith.constant 0 : index
    %3 = vector.load %arg3[%c0_3, %c0_4] : memref<1x128xf32, #tpu.memory_space<vmem>>, vector<1x128xf32>
    %4 = vector.broadcast %3 : vector<1x128xf32> to vector<8x128xf32>
    %5 = arith.addf %2, %4 : vector<8x128xf32>
    %6 = tpu.iota {dimensions = array<i32: 1>} : vector<8x128xi32>
    %c16_i32 = arith.constant 16 : i32
    %7 = vector.broadcast %c16_i32 : i32 to vector<8x128xi32>
    %8 = arith.cmpi slt, %6, %7 : vector<8x128xi32>
    %cst_5 = arith.constant 5.000000e-01 : f32
    %9 = vector.broadcast %cst_5 : f32 to vector<8x128xf32>
    %10 = arith.mulf %9, %5 : vector<8x128xf32>
    %cst_6 = arith.constant -5.000000e+00 : f32
    %cst_7 = arith.constant 1.500000e+00 : f32
    %11 = vector.broadcast %cst_6 : f32 to vector<8x128xf32>
    %12 = arith.maximumf %11, %10 : vector<8x128xf32>
    %13 = vector.broadcast %cst_7 : f32 to vector<8x128xf32>
    %14 = arith.minimumf %13, %12 : vector<8x128xf32>
    %15 = math.exp %14 : vector<8x128xf32>
    %16 = arith.cmpf one, %5, %5 : vector<8x128xf32>
    %cst_8 = arith.constant 0.000000e+00 : f32
    %cst_9 = arith.constant 1.000000e+00 : f32
    %17 = vector.broadcast %cst_8 : f32 to vector<8x128xf32>
    %18 = vector.broadcast %cst_9 : f32 to vector<8x128xf32>
    %19 = arith.select %8, %17, %18 : vector<8x128xi1>, vector<8x128xf32>
    %20 = arith.select %8, %5, %15 : vector<8x128xi1>, vector<8x128xf32>
    %21 = arith.select %16, %19, %20 : vector<8x128xi1>, vector<8x128xf32>
    %c0_10 = arith.constant 0 : index
    %c0_11 = arith.constant 0 : index
    %22 = vector.load %arg4[%c0_10, %c0_11] : memref<8x128xf32, #tpu.memory_space<vmem>>, vector<8x128xf32>
    tpu.vector_store %arg4[%c0_10, %c0_11], %21 {strides = array<i32>} : memref<8x128xf32, #tpu.memory_space<vmem>>, vector<8x128xf32>,
    return
  }
  func.func @transform_0(%arg0: i32) -> (i32, i32) {
    %c0_i32 = arith.constant 0 : i32
    %c0_i32_0 = arith.constant 0 : i32
    return %arg0, %c0_i32 : i32, i32
  }
  func.func @transform_1(%arg0: i32) -> (i32, i32) {
    %c0_i32 = arith.constant 0 : i32
    %c0_i32_0 = arith.constant 0 : i32
    %c0_i32_1 = arith.constant 0 : i32
    return %c0_i32, %c0_i32_0 : i32, i32
  }
  func.func @transform_2(%arg0: i32) -> (i32, i32) {
    %c0_i32 = arith.constant 0 : i32
    %c0_i32_0 = arith.constant 0 : i32
    %c0_i32_1 = arith.constant 0 : i32
    return %c0_i32, %c0_i32_0 : i32, i32
  }
  func.func @transform_3(%arg0: i32) -> (i32, i32) {
    %c0_i32 = arith.constant 0 : i32
    %c0_i32_0 = arith.constant 0 : i32
    return %arg0, %c0_i32 : i32, i32
  }
}

</mosaic_0001>

<llo_original>
// kernel: tpu_custom_call.1
$region0: #{tpu_custom_call.1}
  #allocation0 [shape = 'u32[]', space=smem, size = 0x4, offset = 0x4, fixed_abs, tag = 'smem constant byte address 0x4 - core index']
  #allocation1 [shape = 'u32[144,128]{1,0:T(1,128)}', space=vmem, size = 0x12000, scoped, tag = 'internal scratch']
  %s0 = inlined_call_operand.hbm [shape: f32[8,32], index: 0, kind: input, shape index: {}]
  %s1 = inlined_call_operand.hbm [shape: f32[32,128], index: 1, kind: input, shape index: {}]
  %s2 = inlined_call_operand.vmem [shape: f32[1,128], index: 2, kind: input, shape index: {}]
  %s3 = inlined_call_operand.hbm [shape: f32[8,128], index: 3, kind: output, shape index: {}]
  %s4 = sld [smem:[#allocation0]]
  $region30: #{tpu_custom_call.1} parent=0
    _
  %s6 = ssub.s32 1, %s4
  %s7 = scalar_select 0, %s6, %s4
  $region1: #{tpu_custom_call.1} parent=0
    #allocation2 [shape = 'u8[4096]{0}', space=vmem, size = 0x1000, scoped, tag = 'input window, operand 0, single buffered']
    #allocation3 [shape = 's32[1]{0}', space=sflag, size = 0x4, scoped, tag = 'scoped memory for tpu_custom_call.1']
    #allocation4 [shape = 's32[1]{0}', space=sflag, size = 0x4, scoped, tag = 'scoped memory for tpu_custom_call.1']
    #allocation5 [shape = 'u8[16384]{0}', space=vmem, size = 0x4000, scoped, tag = 'input window, operand 1, single buffered']
    #allocation6 [shape = 's32[1]{0}', space=sflag, size = 0x4, scoped, tag = 'scoped memory for tpu_custom_call.1']
    #allocation7 [shape = 'u8[4096]{0}', space=vmem, size = 0x1000, scoped, tag = 'output window, operand 0, single buffered']
    %8 = vsyncpa [#allocation3], 0
    %9 = vsyncpa [#allocation6], 0
    %10 = vsyncpa [#allocation4], 0
    // Predicated region
    $region2: #{tpu_custom_call.1} parent=1 // pred_check
      _
    $region3: #{tpu_custom_call.1} parent=1 // pred_check_branch
      %12 = sbr.rel (0) target = $region5
    $region4: #{tpu_custom_call.1} parent=1 // pred_region
      %s14 = ssub.s32 128, 128
      %15 = vsyncadd [#allocation3], %s14
      %s17 = sshll.u32 [#allocation2], 4
      %s18 = int_to_ptr.vmem [resolvable:$true] %s17
      %20 = dma.hbm_to_vmem [thread:$0]  %s0, 128, %s18, [#allocation3]
    $region5: #{tpu_custom_call.1} parent=1 // pred_fallthru
      _
    // Predicated region
    $region6: #{tpu_custom_call.1} parent=1 // pred_check
      _
    $region7: #{tpu_custom_call.1} parent=1 // pred_check_branch
      %22 = sbr.rel (0) target = $region9
    $region8: #{tpu_custom_call.1} parent=1 // pred_region
      %s24 = ssub.s32 512, 512
      %25 = vsyncadd [#allocation6], %s24
      %s26 = sshll.u32 [#allocation5], 4
      %s27 = int_to_ptr.vmem [resolvable:$true] %s26
      %32 = dma.hbm_to_vmem [thread:$0]  %s1, 512, %s27, [#allocation6], 128, 128, 8
    $region9: #{tpu_custom_call.1} parent=1 // pred_fallthru
      _
    // Predicated region
    $region10: #{tpu_custom_call.1} parent=1 // pred_check
      _
    $region11: #{tpu_custom_call.1} parent=1 // pred_check_branch
      %34 = sbr.rel (0) target = $region13
    $region12: #{tpu_custom_call.1} parent=1 // pred_region
      _
    $region13: #{tpu_custom_call.1} parent=1 // pred_fallthru
      _
    // Predicated region
    $region14: #{tpu_custom_call.1} parent=1 // pred_check
      _
    $region15: #{tpu_custom_call.1} parent=1 // pred_check_branch
      %36 = sbr.rel (0) target = $region17
    $region16: #{tpu_custom_call.1} parent=1 // pred_region
      %37 = dma.done [#allocation3], 128
    $region17: #{tpu_custom_call.1} parent=1 // pred_fallthru
      _
    // Predicated region
    $region18: #{tpu_custom_call.1} parent=1 // pred_check
      _
    $region19: #{tpu_custom_call.1} parent=1 // pred_check_branch
      %39 = sbr.rel (0) target = $region21
    $region20: #{tpu_custom_call.1} parent=1 // pred_region
      %40 = dma.done [#allocation6], 512
    $region21: #{tpu_custom_call.1} parent=1 // pred_fallthru
      _
    %v41 = vld [vmem:[#allocation2] sm:$0xff]
    %v42 = vld [vmem:[#allocation5] sm:$0xff]
    %v43 = vld [vmem:[#allocation5 + $0x8] sm:$0xff]
    %v44 = vld [vmem:[#allocation5 + $0x10] sm:$0xff]
    %v45 = vld [vmem:[#allocation5 + $0x18] sm:$0xff]
    %v46 = vld [vmem:[%s2] sm:$0x1]
    %v48 = vlaneseq
    %v49 = vshrl.u32 %v48, 7
    %v50 = vsub.s32 0, %v49
    %v51 = vrot.slane %v46, %v50
    %vm53 = vcmask 261120
    %v55 = vsel %vm53, %v41, 0
    %57 = vmatprep.subr.mxu0 0.0
    %58 = vmatpush1.msra.mxu0 0.0
    %59 = vmatprep.subr.mxu0 0.0
    %60 = vmatpush1.msra.mxu0 0.0
    %61 = vmatprep.subr.mxu0 0.0
    %62 = vmatpush1.msra.mxu0 0.0
    %63 = vmatprep.subr.mxu0 0.0
    %64 = vmatpush1.msra.mxu0 0.0
    %65 = vmatprep.subr.mxu0 0.0
    %66 = vmatpush1.msra.mxu0 0.0
    %67 = vmatprep.subr.mxu0 0.0
    %68 = vmatpush1.msra.mxu0 0.0
    %69 = vmatprep.subr.mxu0 0.0
    %70 = vmatpush1.msra.mxu0 0.0
    %71 = vmatprep.subr.mxu0 0.0
    %72 = vmatpush1.msra.mxu0 0.0
    %73 = vmatprep.subr.mxu0 0.0
    %74 = vmatpush1.msra.mxu0 0.0
    %75 = vmatprep.subr.mxu0 0.0
    %76 = vmatpush1.msra.mxu0 0.0
    %77 = vmatprep.subr.mxu0 0.0
    %78 = vmatpush1.msra.mxu0 0.0
    %79 = vmatprep.subr.mxu0 0.0
    %80 = vmatpush1.msra.mxu0 0.0
    %81 = vmatprep.subr.mxu0 0.0
    %82 = vmatpush1.msra.mxu0 %v45
    %83 = vmatprep.subr.mxu0 0.0
    %84 = vmatpush1.msra.mxu0 %v44
    %85 = vmatprep.subr.mxu0 0.0
    %86 = vmatpush1.msra.mxu0 %v43
    %87 = vmatprep.subr.mxu0 0.0
    %88 = vmatpush1.msra.mxu0 %v42
    %89 = vmatprep.subr.mxu0 0.0
    %90 = vmatpush2.msra.mxu0 0.0
    %91 = vmatprep.subr.mxu0 0.0
    %92 = vmatpush2.msra.mxu0 0.0
    %93 = vmatprep.subr.mxu0 0.0
    %94 = vmatpush2.msra.mxu0 0.0
    %95 = vmatprep.subr.mxu0 0.0
    %96 = vmatpush2.msra.mxu0 0.0
    %97 = vmatprep.subr.mxu0 0.0
    %98 = vmatpush2.msra.mxu0 0.0
    %99 = vmatprep.subr.mxu0 0.0
    %100 = vmatpush2.msra.mxu0 0.0
    %101 = vmatprep.subr.mxu0 0.0
    %102 = vmatpush2.msra.mxu0 0.0
    %103 = vmatprep.subr.mxu0 0.0
    %104 = vmatpush2.msra.mxu0 0.0
    %105 = vmatprep.subr.mxu0 0.0
    %106 = vmatpush2.msra.mxu0 0.0
    %107 = vmatprep.subr.mxu0 0.0
    %108 = vmatpush2.msra.mxu0 0.0
    %109 = vmatprep.subr.mxu0 0.0
    %110 = vmatpush2.msra.mxu0 0.0
    %111 = vmatprep.subr.mxu0 0.0
    %112 = vmatpush2.msra.mxu0 0.0
    %113 = vmatprep.subr.mxu0 0.0
    %114 = vmatpush2.msra.mxu0 0.0
    %115 = vmatprep.subr.mxu0 0.0
    %116 = vmatpush2.msra.mxu0 0.0
    %117 = vmatprep.subr.mxu0 0.0
    %118 = vmatpush2.msra.mxu0 0.0
    %119 = vmatprep.subr.mxu0 0.0
    %120 = vmatpush2.msra.mxu0 0.0
    %121 = vmatprep.mubr.f32.mxu0 0.0
    %122 = vmatmul.mubr.f32.gmra.mxu0 %v55
    %v123 = vpop.f32.mrf.mxu0
    %v124 = vadd.f32 %v51, %v123
    %v125 = vpop.f32.mrf.mxu0
    %126 = vdwg.mxu0
    %v127 = vlaneseq
    %v128 = vand.u32 %v127, 127
    %vm129 = vcmp.lt.s32.totalorder %v128, 16
    %v130 = vmul.f32 %v124, 0.5
    %v131 = vmax.f32 %v130, -5.0
    %v132 = vmin.f32 %v131, 1.5
    %v133 = vmul.f32 %v132, 1.442695
    %v134 = vpow.pop %v133
    %vm135 = vcmp.ne.f32.partialorder %v124, %v124
    %v136 = vsel %vm129, 0.0, 1.0
    %v137 = vsel %vm129, %v124, %v134
    %v138 = vsel %vm135, %v136, %v137
    %139 = vst [vmem:[#allocation7] sm:$0xff] %v138
    // Predicated region
    $region22: #{tpu_custom_call.1} parent=1 // pred_check
      _
    $region23: #{tpu_custom_call.1} parent=1 // pred_check_branch
      %141 = sbr.rel (0) target = $region25
    $region24: #{tpu_custom_call.1} parent=1 // pred_region
      %s143 = ssub.s32 128, 128
      %144 = vsyncadd [#allocation4], %s143
      %s146 = sshll.u32 [#allocation7], 4
      %s147 = int_to_ptr.vmem [resolvable:$true] %s146
      %149 = dma.vmem_to_hbm [thread:$0]  %s147, 128, %s3, [#allocation4]
    $region25: #{tpu_custom_call.1} parent=1 // pred_fallthru
      _
    // Predicated region
    $region26: #{tpu_custom_call.1} parent=1 // pred_check
      _
    $region27: #{tpu_custom_call.1} parent=1 // pred_check_branch
      %151 = sbr.rel (0) target = $region29
    $region28: #{tpu_custom_call.1} parent=1 // pred_region
      %152 = dma.done [#allocation4], 128
    $region29: #{tpu_custom_call.1} parent=1 // pred_fallthru
      _
    %153 = vsyncpa [#allocation3], 1
    %154 = vsyncpa [#allocation6], 1
    %155 = vsyncpa [#allocation4], 1

</llo_original>
